<compile_context>
chip_gen: v6e
topology: v6e:2x2x1
jax: 0.10.0
libtpu: 0.0.40
codegen_flags: <defaults>
</compile_context>

<pallas_src>
import numpy as np
import jax
import jax.numpy as jnp
from jax import lax
from jax.experimental import pallas as pl
from jax.experimental.pallas import tpu as pltpu

VOCAB = 31          # embedding num_embeddings == embedding_dim == GRU input size
INPUT_DIM = 31
VPAD = 32           # one-hot / table contraction dim (vocab rounded up)


def _round_up(x, m):
    return -(-x // m) * m


# ----------------------------------------------------------------------------
# Pallas kernel: per-batch-tile GRU recurrence + MLP head (the hot path).
# ----------------------------------------------------------------------------
def make_gru_kernel(T, BB, H):
    def kernel(maxlen_ref, len_ref, tok_ref,
               table_ref, w_hh_ref, b_hn_ref,
               w1_ref, b1_ref, w2_ref, b2_ref, wo_ref, bo_ref,
               out_ref):
        """One batch tile.

        maxlen_ref: (nb,)  int32 SMEM (scalar prefetch) — per-tile max length
        len_ref   : (BB,1) int32 sequence lengths
        tok_ref   : (T*BB, 1) int32 time-major tokens (rows t*BB:(t+1)*BB = step t)
        table_ref : (VPAD, 3H) token -> gate preact; embedding, W_ih and the
                    foldable biases (b_ih all gates + b_hh r,z) already fused.
        w_hh_ref  : (H, 3H)   b_hn_ref: (1, H)  (n-gate b_hh stays inside r*(...))
        """
        lens = len_ref[...]                                   # (BB, 1) int32
        table = table_ref[...]                                # (VPAD, 3H)
        w_hh = w_hh_ref[...]                                  # (H, 3H)
        b_hn = b_hn_ref[...]                                  # (1, H)
        lane_ids = lax.broadcasted_iota(jnp.int32, (BB, VPAD), 1)   # hoisted

        # Dynamic trip count: skip steps where every row of this tile is frozen.
        n_steps = jnp.minimum(jnp.int32(T), maxlen_ref[pl.program_id(0)])

        def step(t, h):
            start = pl.multiple_of(t * BB, BB)
            tok_t = tok_ref[pl.ds(start, BB), :]                         # (BB,1) i32
            onehot = (lane_ids == tok_t).astype(jnp.float32)             # (BB,VPAD)
            # fused embedding lookup + input projection + folded biases
            gi = jnp.dot(onehot, table, preferred_element_type=jnp.float32)   # (BB,3H)
            gh = jnp.dot(h, w_hh, preferred_element_type=jnp.float32)         # (BB,3H)
            # PyTorch GRU gate order: r, z, n  (gates contiguous at stride H)
            rz = jax.nn.sigmoid(gi[:, :2 * H] + gh[:, :2 * H])
            r = rz[:, :H]
            z = rz[:, H:]
            n = jnp.tanh(gi[:, 2 * H:] + r * (gh[:, 2 * H:] + b_hn))
            h_new = (1.0 - z) * n + z * h
            # packed-sequence semantics: freeze rows once t >= length[b]
            return jnp.where(lens > t, h_new, h)

        h0 = jnp.zeros((BB, H), jnp.float32)
        h = lax.fori_loop(jnp.int32(0), n_steps, step, h0)

        # MLP head: relu(linear1) -> tanh(linear2) -> output
        y = jnp.maximum(
            jnp.dot(h, w1_ref[...], preferred_element_type=jnp.float32) + b1_ref[...],
            0.0)
        y = jnp.tanh(
            jnp.dot(y, w2_ref[...], preferred_element_type=jnp.float32) + b2_ref[...])
        # degenerate (BB,H)@(H,1) MXU pass -> cheaper lane reduction
        out_ref[...] = jnp.sum(y * wo_ref[...], axis=-1, keepdims=True) + bo_ref[...]

    return kernel


# ----------------------------------------------------------------------------
# Weight packing: transpose to right-multiply form, fuse embedding + W_ih +
# foldable biases into one token table (all f32, math stays exact).
# ----------------------------------------------------------------------------
def pack_params(params):
    H = params["w_hh"].shape[1]
    w_ih, w_hh = params["w_ih"], params["w_hh"]
    b_ih, b_hh = params["b_ih"], params["b_hh"]

    # (31, 3H): input-to-gate weights, transposed, gates (r,z,n) contiguous.
    w_ih_t = jnp.concatenate([w_ih[g * H:(g + 1) * H, :].T for g in range(3)], axis=1)
    # b_ih (all gates) + b_hh (r,z) can sit in front of the nonlinearity;
    # the n-gate b_hh must stay inside r*(gh_n + b_hn).
    b_gi = jnp.concatenate([b_ih[0:H] + b_hh[0:H],
                            b_ih[H:2 * H] + b_hh[H:2 * H],
                            b_ih[2 * H:3 * H]])
    # token -> gate-preactivation table (embedding row 0 is the zero padding row).
    table = jnp.zeros((VPAD, 3 * H), jnp.float32)
    table = table.at[:VOCAB, :].set(params["embedding"] @ w_ih_t + b_gi[None, :])

    w_hh_t = jnp.concatenate([w_hh[g * H:(g + 1) * H, :].T for g in range(3)], axis=1)
    b_hn = b_hh[2 * H:3 * H].reshape(1, H)

    w1_t, b1 = params["w1"].T, params["b1"].reshape(1, H)
    w2_t, b2 = params["w2"].T, params["b2"].reshape(1, H)
    wo = params["wo"].reshape(1, H)
    bo = params["bo"].reshape(1, 1)
    return tuple(jnp.asarray(a, jnp.float32)
                 for a in (table, w_hh_t, b_hn, w1_t, b1, w2_t, b2, wo, bo))


# ----------------------------------------------------------------------------
# Wrapper (glue: batch padding/tiling, token layout, parameter packing).
# ----------------------------------------------------------------------------
def rnn_forward(tokens, lengths, params, *, block_b=256, vmem_budget_bytes=12 << 20):
    B, T = tokens.shape
    H = params["w_hh"].shape[1]

    # ---- batch tile size ---------------------------------------------------
    b8 = _round_up(B, 8)
    # The (T*BB, 1) int32 token block is lane-padded to 128 lanes and double
    # buffered (~1 KiB of VMEM per (step,row)); everything else is tiny.
    bb_cap = max(8, (vmem_budget_bytes // (T * 1024)) // 8 * 8)
    BB = max(8, min(block_b, b8, bb_cap) // 8 * 8)
    # If the whole batch fits in one tile, split it so the grid has >= 2 steps
    # and dimension_semantics=("parallel",) can occupy both v7x TensorCores.
    if 8 < b8 <= BB:
        BB = _round_up(-(-b8 // 2), 8)
    b_pad = _round_up(B, BB)
    nb = b_pad // BB

    tokens = tokens.astype(jnp.int32)
    lengths = lengths.astype(jnp.int32)
    if b_pad != B:
        tokens = jnp.pad(tokens, ((0, b_pad - B), (0, 0)))    # pad token 0
        lengths = jnp.pad(lengths, (0, b_pad - B))             # length 0 -> frozen

    # Time-major tokens, one token per sublane row: (nb, T*BB, 1).
    tok_tiles = (tokens.reshape(nb, BB, T)
                       .transpose(0, 2, 1)
                       .reshape(nb, T * BB, 1))
    len2d = lengths.reshape(b_pad, 1)
    tile_max = jnp.minimum(jnp.max(lengths.reshape(nb, BB), axis=1), T).astype(jnp.int32)

    packed = pack_params(params)
    weight_specs = [pl.BlockSpec(p.shape, lambda i, ml: (0, 0)) for p in packed]

    out = pl.pallas_call(
        make_gru_kernel(T, BB, H),
        out_shape=jax.ShapeDtypeStruct((b_pad, 1), jnp.float32),
        grid_spec=pltpu.PrefetchScalarGridSpec(
            num_scalar_prefetch=1,                      # per-tile max length -> SMEM
            grid=(nb,),
            in_specs=[pl.BlockSpec((BB, 1), lambda i, ml: (i, 0)),
                      pl.BlockSpec((None, T * BB, 1), lambda i, ml: (i, 0, 0))]
                     + weight_specs,
            out_specs=pl.BlockSpec((BB, 1), lambda i, ml: (i, 0))),
        compiler_params=pltpu.CompilerParams(
            dimension_semantics=("parallel",),
            vmem_limit_bytes=32 * 1024 * 1024),
    )(tile_max, len2d, tok_tiles, *packed)

    return out[:B]           # (B, 1); PyTorch's h.squeeze() assumes B > 1


# ----------------------------------------------------------------------------
# Pure-JAX reference (same math, no Pallas) for a correctness sanity check.
# ----------------------------------------------------------------------------
def rnn_reference(tokens, lengths, params):
    B, T = tokens.shape
    H = params["w_hh"].shape[1]
    emb = params["embedding"][tokens]                 # (B, T, 31)
    h = jnp.zeros((B, H), jnp.float32)
    for t in range(T):
        x_t = emb[:, t, :]
        gi = x_t @ params["w_ih"].T + params["b_ih"]
        gh = h @ params["w_hh"].T + params["b_hh"]
        r = jax.nn.sigmoid(gi[:, 0:H] + gh[:, 0:H])
        z = jax.nn.sigmoid(gi[:, H:2 * H] + gh[:, H:2 * H])
        n = jnp.tanh(gi[:, 2 * H:3 * H] + r * gh[:, 2 * H:3 * H])
        h_new = (1.0 - z) * n + z * h
        mask = (lengths > t)[:, None]
        h = jnp.where(mask, h_new, h)
    y = jax.nn.relu(h @ params["w1"].T + params["b1"])
    y = jnp.tanh(y @ params["w2"].T + params["b2"])
    return y @ params["wo"].T + params["bo"]


# ----------------------------------------------------------------------------
# Deterministic parameter initialization (shapes from Rnn.__init__).
# ----------------------------------------------------------------------------
def init_params(hidden_dim, key):
    keys = jax.random.split(key, 10)
    s = 0.1
    emb = jax.random.normal(keys[0], (VOCAB, VOCAB), jnp.float32) * s
    emb = emb.at[0].set(0.0)                          # padding_idx=0
    return {
        "embedding": emb,
        "w_ih": jax.random.normal(keys[1], (3 * hidden_dim, INPUT_DIM), jnp.float32) * s,
        "w_hh": jax.random.normal(keys[2], (3 * hidden_dim, hidden_dim), jnp.float32) * s,
        "b_ih": jax.random.normal(keys[3], (3 * hidden_dim,), jnp.float32) * s,
        "b_hh": jax.random.normal(keys[4], (3 * hidden_dim,), jnp.float32) * s,
        "w1": jax.random.normal(keys[5], (hidden_dim, hidden_dim), jnp.float32) * s,
        "b1": jnp.full((hidden_dim,), 0.01, jnp.float32),
        "w2": jax.random.normal(keys[6], (hidden_dim, hidden_dim), jnp.float32) * s,
        "b2": jnp.full((hidden_dim,), 0.01, jnp.float32),
        "wo": jax.random.normal(keys[7], (1, hidden_dim), jnp.float32) * s,
        "bo": jnp.full((1,), 0.01, jnp.float32),
    }


if __name__ == "__main__":
    B, T, H = 8, 8, 32
    key = jax.random.PRNGKey(0)
    k_tok, k_par = jax.random.split(key)

    # lengths sorted descending (pack_padded_sequence requirement), padding token = 0
    lengths = jnp.array([8, 7, 6, 5, 4, 3, 2, 2], dtype=jnp.int32)
    tokens = jax.random.randint(k_tok, (B, T), 1, VOCAB, dtype=jnp.int32)
    pos = jnp.arange(T)[None, :]
    tokens = jnp.where(pos < lengths[:, None], tokens, 0)

    params = init_params(H, k_par)

    out = rnn_forward(tokens, lengths, params)
    out = jax.block_until_ready(out)

    ref = rnn_reference(tokens, lengths, params)
    np.testing.assert_allclose(np.asarray(out), np.asarray(ref), rtol=1e-3, atol=1e-4)

    print("KERNEL_OK")
</pallas_src>

<mosaic_0001>
module attributes {stable_mosaic.version = 11 : i64} {
  func.func @kernel(%arg0: i32, %arg1: memref<1xi32, #tpu.memory_space<smem>>, %arg2: memref<8x1xi32, #tpu.memory_space<vmem>>, %arg3: memref<1x64x1xi32, #tpu.memory_space<vmem>>, %arg4: memref<32x96xf32, #tpu.memory_space<vmem>>, %arg5: memref<32x96xf32, #tpu.memory_space<vmem>>, %arg6: memref<1x32xf32, #tpu.memory_space<vmem>>, %arg7: memref<32x32xf32, #tpu.memory_space<vmem>>, %arg8: memref<1x32xf32, #tpu.memory_space<vmem>>, %arg9: memref<32x32xf32, #tpu.memory_space<vmem>>, %arg10: memref<1x32xf32, #tpu.memory_space<vmem>>, %arg11: memref<1x32xf32, #tpu.memory_space<vmem>>, %arg12: memref<1x1xf32, #tpu.memory_space<vmem>>, %arg13: memref<8x1xf32, #tpu.memory_space<vmem>>) attributes {dimension_semantics = [#tpu.dimension_semantics<parallel>], iteration_bounds = array<i64: 1>, scalar_prefetch = 1 : i64, scratch_operands = 0 : i64, tpu.core_type = #tpu.core_type<tc>, window_params = [{transform_indices = @transform_0, window_bounds = array<i64: 8, 1>}, {transform_indices = @transform_1, window_bounds = array<i64: 1, 64, 1>}, {pipeline_mode = #tpu.pipeline_mode<synchronous>, transform_indices = @transform_2, window_bounds = array<i64: 32, 96>}, {pipeline_mode = #tpu.pipeline_mode<synchronous>, transform_indices = @transform_3, window_bounds = array<i64: 32, 96>}, {pipeline_mode = #tpu.pipeline_mode<synchronous>, transform_indices = @transform_4, window_bounds = array<i64: 1, 32>}, {pipeline_mode = #tpu.pipeline_mode<synchronous>, transform_indices = @transform_5, window_bounds = array<i64: 32, 32>}, {pipeline_mode = #tpu.pipeline_mode<synchronous>, transform_indices = @transform_6, window_bounds = array<i64: 1, 32>}, {pipeline_mode = #tpu.pipeline_mode<synchronous>, transform_indices = @transform_7, window_bounds = array<i64: 32, 32>}, {pipeline_mode = #tpu.pipeline_mode<synchronous>, transform_indices = @transform_8, window_bounds = array<i64: 1, 32>}, {pipeline_mode = #tpu.pipeline_mode<synchronous>, transform_indices = @transform_9, window_bounds = array<i64: 1, 32>}, {pipeline_mode = #tpu.pipeline_mode<synchronous>, transform_indices = @transform_10, window_bounds = array<i64: 1, 1>}, {transform_indices = @transform_11, window_bounds = array<i64: 8, 1>}]} {
    %c0 = arith.constant 0 : index
    %c0_0 = arith.constant 0 : index
    %0 = vector.load %arg2[%c0, %c0_0] : memref<8x1xi32, #tpu.memory_space<vmem>>, vector<8x1xi32>
    %c0_1 = arith.constant 0 : index
    %c0_2 = arith.constant 0 : index
    %1 = vector.load %arg4[%c0_1, %c0_2] : memref<32x96xf32, #tpu.memory_space<vmem>>, vector<32x96xf32>
    %c0_3 = arith.constant 0 : index
    %c0_4 = arith.constant 0 : index
    %2 = vector.load %arg5[%c0_3, %c0_4] : memref<32x96xf32, #tpu.memory_space<vmem>>, vector<32x96xf32>
    %c0_5 = arith.constant 0 : index
    %c0_6 = arith.constant 0 : index
    %3 = vector.load %arg6[%c0_5, %c0_6] : memref<1x32xf32, #tpu.memory_space<vmem>>, vector<1x32xf32>
    %4 = tpu.iota {dimensions = array<i32: 1>} : vector<8x32xi32>
    %5 = arith.index_cast %arg0 : i32 to index
    %6 = memref.load %arg1[%5] : memref<1xi32, #tpu.memory_space<smem>>
    %c8_i32 = arith.constant 8 : i32
    %7 = arith.minsi %c8_i32, %6 : i32
    %cst = arith.constant 0.000000e+00 : f32
    %8 = vector.broadcast %cst : f32 to vector<8x32xf32>
    %c0_i32 = arith.constant 0 : i32
    %9 = arith.subi %7, %c0_i32 : i32
    %10 = arith.addi %c0_i32, %9 : i32
    %c1_i32 = arith.constant 1 : i32
    %11 = scf.for %arg14 = %c0_i32 to %10 step %c1_i32 iter_args(%arg15 = %8) -> (vector<8x32xf32>)  : i32 {
      %c8_i32_25 = arith.constant 8 : i32
      %34 = arith.muli %arg14, %c8_i32_25 : i32
      %35 = tpu.assume_multiple %34, 8 : i32
      %c0_26 = arith.constant 0 : index
      %36 = arith.index_cast %35 : i32 to index
      %c0_27 = arith.constant 0 : index
      %37 = vector.load %arg3[%c0_26, %36, %c0_27] : memref<1x64x1xi32, #tpu.memory_space<vmem>>, vector<1x8x1xi32>
      %38 = vector.shape_cast %37 : vector<1x8x1xi32> to vector<8x1xi32>
      %39 = vector.broadcast %38 : vector<8x1xi32> to vector<8x32xi32>
      %40 = arith.cmpi eq, %4, %39 : vector<8x32xi32>
      %41 = arith.extui %40 : vector<8x32xi1> to vector<8x32xi32>
      %42 = arith.sitofp %41 : vector<8x32xi32> to vector<8x32xf32>
      %cst_28 = arith.constant dense<0.000000e+00> : vector<8x96xf32>
      %43 = tpu.matmul %42, %1, %cst_28 {dimension_numbers = #tpu.dot_dimension_numbers<[1], [0], [0], [1], [0, 0, 1, 1], [], []>} : vector<8x32xf32>, vector<32x96xf32>, vector<8x96xf32> -> vector<8x96xf32>
      %cst_29 = arith.constant dense<0.000000e+00> : vector<8x96xf32>
      %44 = tpu.matmul %arg15, %2, %cst_29 {dimension_numbers = #tpu.dot_dimension_numbers<[1], [0], [0], [1], [0, 0, 1, 1], [], []>} : vector<8x32xf32>, vector<32x96xf32>, vector<8x96xf32> -> vector<8x96xf32>
      %45 = vector.extract_strided_slice %43 {offsets = [0, 0], sizes = [8, 64], strides = [1, 1]} : vector<8x96xf32> to vector<8x64xf32>
      %46 = vector.extract_strided_slice %44 {offsets = [0, 0], sizes = [8, 64], strides = [1, 1]} : vector<8x96xf32> to vector<8x64xf32>
      %47 = arith.addf %45, %46 : vector<8x64xf32>
      %48 = arith.negf %47 : vector<8x64xf32>
      %49 = math.exp %48 : vector<8x64xf32>
      %cst_30 = arith.constant 1.000000e+00 : f32
      %50 = vector.broadcast %cst_30 : f32 to vector<8x64xf32>
      %51 = arith.addf %50, %49 : vector<8x64xf32>
      %52 = arith.divf %50, %51 : vector<8x64xf32>
      %53 = vector.extract_strided_slice %52 {offsets = [0, 0], sizes = [8, 32], strides = [1, 1]} : vector<8x64xf32> to vector<8x32xf32>
      %54 = vector.extract_strided_slice %52 {offsets = [0, 32], sizes = [8, 32], strides = [1, 1]} : vector<8x64xf32> to vector<8x32xf32>
      %55 = vector.extract_strided_slice %43 {offsets = [0, 64], sizes = [8, 32], strides = [1, 1]} : vector<8x96xf32> to vector<8x32xf32>
      %56 = vector.extract_strided_slice %44 {offsets = [0, 64], sizes = [8, 32], strides = [1, 1]} : vector<8x96xf32> to vector<8x32xf32>
      %57 = vector.broadcast %3 : vector<1x32xf32> to vector<8x32xf32>
      %58 = arith.addf %56, %57 : vector<8x32xf32>
      %59 = arith.mulf %53, %58 : vector<8x32xf32>
      %60 = arith.addf %55, %59 : vector<8x32xf32>
      %61 = math.tanh %60 : vector<8x32xf32>
      %cst_31 = arith.constant 1.000000e+00 : f32
      %62 = vector.broadcast %cst_31 : f32 to vector<8x32xf32>
      %63 = arith.subf %62, %54 : vector<8x32xf32>
      %64 = arith.mulf %63, %61 : vector<8x32xf32>
      %65 = arith.mulf %54, %arg15 : vector<8x32xf32>
      %66 = arith.addf %64, %65 : vector<8x32xf32>
      %67 = vector.broadcast %arg14 : i32 to vector<8x1xi32>
      %68 = arith.cmpi sgt, %0, %67 : vector<8x1xi32>
      %69 = vector.shape_cast %68 : vector<8x1xi1> to vector<8x1xi1>
      %70 = vector.broadcast %69 : vector<8x1xi1> to vector<8x32xi1>
      %71 = arith.select %70, %66, %arg15 : vector<8x32xi1>, vector<8x32xf32>
      scf.yield %71 : vector<8x32xf32>
    }
    %c0_7 = arith.constant 0 : index
    %c0_8 = arith.constant 0 : index
    %12 = vector.load %arg7[%c0_7, %c0_8] : memref<32x32xf32, #tpu.memory_space<vmem>>, vector<32x32xf32>
    %cst_9 = arith.constant dense<0.000000e+00> : vector<8x32xf32>
    %13 = tpu.matmul %11, %12, %cst_9 {dimension_numbers = #tpu.dot_dimension_numbers<[1], [0], [0], [1], [0, 0, 1, 1], [], []>} : vector<8x32xf32>, vector<32x32xf32>, vector<8x32xf32> -> vector<8x32xf32>
    %c0_10 = arith.constant 0 : index
    %c0_11 = arith.constant 0 : index
    %14 = vector.load %arg8[%c0_10, %c0_11] : memref<1x32xf32, #tpu.memory_space<vmem>>, vector<1x32xf32>
    %15 = vector.broadcast %14 : vector<1x32xf32> to vector<8x32xf32>
    %16 = arith.addf %13, %15 : vector<8x32xf32>
    %cst_12 = arith.constant 0.000000e+00 : f32
    %17 = vector.broadcast %cst_12 : f32 to vector<8x32xf32>
    %18 = arith.maximumf %16, %17 : vector<8x32xf32>
    %c0_13 = arith.constant 0 : index
    %c0_14 = arith.constant 0 : index
    %19 = vector.load %arg9[%c0_13, %c0_14] : memref<32x32xf32, #tpu.memory_space<vmem>>, vector<32x32xf32>
    %cst_15 = arith.constant dense<0.000000e+00> : vector<8x32xf32>
    %20 = tpu.matmul %18, %19, %cst_15 {dimension_numbers = #tpu.dot_dimension_numbers<[1], [0], [0], [1], [0, 0, 1, 1], [], []>} : vector<8x32xf32>, vector<32x32xf32>, vector<8x32xf32> -> vector<8x32xf32>
    %c0_16 = arith.constant 0 : index
    %c0_17 = arith.constant 0 : index
    %21 = vector.load %arg10[%c0_16, %c0_17] : memref<1x32xf32, #tpu.memory_space<vmem>>, vector<1x32xf32>
    %22 = vector.broadcast %21 : vector<1x32xf32> to vector<8x32xf32>
    %23 = arith.addf %20, %22 : vector<8x32xf32>
    %24 = math.tanh %23 : vector<8x32xf32>
    %c0_18 = arith.constant 0 : index
    %c0_19 = arith.constant 0 : index
    %25 = vector.load %arg11[%c0_18, %c0_19] : memref<1x32xf32, #tpu.memory_space<vmem>>, vector<1x32xf32>
    %26 = vector.broadcast %25 : vector<1x32xf32> to vector<8x32xf32>
    %27 = arith.mulf %24, %26 : vector<8x32xf32>
    %cst_20 = arith.constant dense<0.000000e+00> : vector<8xf32>
    %28 = vector.multi_reduction <add>, %27, %cst_20 [1] : vector<8x32xf32> to vector<8xf32>
    %29 = vector.shape_cast %28 : vector<8xf32> to vector<8x1xf32>
    %c0_21 = arith.constant 0 : index
    %c0_22 = arith.constant 0 : index
    %30 = vector.load %arg12[%c0_21, %c0_22] : memref<1x1xf32, #tpu.memory_space<vmem>>, vector<1x1xf32>
    %31 = vector.broadcast %30 : vector<1x1xf32> to vector<8x1xf32>
    %32 = arith.addf %29, %31 : vector<8x1xf32>
    %c0_23 = arith.constant 0 : index
    %c0_24 = arith.constant 0 : index
    %33 = vector.load %arg13[%c0_23, %c0_24] : memref<8x1xf32, #tpu.memory_space<vmem>>, vector<8x1xf32>
    tpu.vector_store %arg13[%c0_23, %c0_24], %32 {strides = array<i32>} : memref<8x1xf32, #tpu.memory_space<vmem>>, vector<8x1xf32>,
    return
  }
  func.func @transform_0(%arg0: i32, %arg1: memref<1xi32, #tpu.memory_space<smem>>) -> (i32, i32) {
    %c0_i32 = arith.constant 0 : i32
    %c0_i32_0 = arith.constant 0 : i32
    return %arg0, %c0_i32 : i32, i32
  }
  func.func @transform_1(%arg0: i32, %arg1: memref<1xi32, #tpu.memory_space<smem>>) -> (i32, i32, i32) {
    %c0_i32 = arith.constant 0 : i32
    %c0_i32_0 = arith.constant 0 : i32
    %c0_i32_1 = arith.constant 0 : i32
    return %arg0, %c0_i32, %c0_i32_0 : i32, i32, i32
  }
  func.func @transform_2(%arg0: i32, %arg1: memref<1xi32, #tpu.memory_space<smem>>) -> (i32, i32) {
    %c0_i32 = arith.constant 0 : i32
    %c0_i32_0 = arith.constant 0 : i32
    %c0_i32_1 = arith.constant 0 : i32
    return %c0_i32, %c0_i32_0 : i32, i32
  }
  func.func @transform_3(%arg0: i32, %arg1: memref<1xi32, #tpu.memory_space<smem>>) -> (i32, i32) {
    %c0_i32 = arith.constant 0 : i32
    %c0_i32_0 = arith.constant 0 : i32
    %c0_i32_1 = arith.constant 0 : i32
    return %c0_i32, %c0_i32_0 : i32, i32
  }
  func.func @transform_4(%arg0: i32, %arg1: memref<1xi32, #tpu.memory_space<smem>>) -> (i32, i32) {
    %c0_i32 = arith.constant 0 : i32
    %c0_i32_0 = arith.constant 0 : i32
    %c0_i32_1 = arith.constant 0 : i32
    return %c0_i32, %c0_i32_0 : i32, i32
  }
  func.func @transform_5(%arg0: i32, %arg1: memref<1xi32, #tpu.memory_space<smem>>) -> (i32, i32) {
    %c0_i32 = arith.constant 0 : i32
    %c0_i32_0 = arith.constant 0 : i32
    %c0_i32_1 = arith.constant 0 : i32
    return %c0_i32, %c0_i32_0 : i32, i32
  }
  func.func @transform_6(%arg0: i32, %arg1: memref<1xi32, #tpu.memory_space<smem>>) -> (i32, i32) {
    %c0_i32 = arith.constant 0 : i32
    %c0_i32_0 = arith.constant 0 : i32
    %c0_i32_1 = arith.constant 0 : i32
    return %c0_i32, %c0_i32_0 : i32, i32
  }
  func.func @transform_7(%arg0: i32, %arg1: memref<1xi32, #tpu.memory_space<smem>>) -> (i32, i32) {
    %c0_i32 = arith.constant 0 : i32
    %c0_i32_0 = arith.constant 0 : i32
    %c0_i32_1 = arith.constant 0 : i32
    return %c0_i32, %c0_i32_0 : i32, i32
  }
  func.func @transform_8(%arg0: i32, %arg1: memref<1xi32, #tpu.memory_space<smem>>) -> (i32, i32) {
    %c0_i32 = arith.constant 0 : i32
    %c0_i32_0 = arith.constant 0 : i32
    %c0_i32_1 = arith.constant 0 : i32
    return %c0_i32, %c0_i32_0 : i32, i32
  }
  func.func @transform_9(%arg0: i32, %arg1: memref<1xi32, #tpu.memory_space<smem>>) -> (i32, i32) {
    %c0_i32 = arith.constant 0 : i32
    %c0_i32_0 = arith.constant 0 : i32
    %c0_i32_1 = arith.constant 0 : i32
    return %c0_i32, %c0_i32_0 : i32, i32
  }
  func.func @transform_10(%arg0: i32, %arg1: memref<1xi32, #tpu.memory_space<smem>>) -> (i32, i32) {
    %c0_i32 = arith.constant 0 : i32
    %c0_i32_0 = arith.constant 0 : i32
    %c0_i32_1 = arith.constant 0 : i32
    return %c0_i32, %c0_i32_0 : i32, i32
  }
  func.func @transform_11(%arg0: i32, %arg1: memref<1xi32, #tpu.memory_space<smem>>) -> (i32, i32) {
    %c0_i32 = arith.constant 0 : i32
    %c0_i32_0 = arith.constant 0 : i32
    return %arg0, %c0_i32 : i32, i32
  }
}

</mosaic_0001>

<llo_original>
// kernel: tpu_custom_call.1
$region0: #{tpu_custom_call.1}
  #allocation0 [shape = 'u32[]', space=smem, size = 0x4, offset = 0x4, fixed_abs, tag = 'smem constant byte address 0x4 - core index']
  #allocation1 [shape = 'u32[144,128]{1,0:T(1,128)}', space=vmem, size = 0x12000, scoped, tag = 'internal scratch']
  #allocation2 [shape = 's32[1]{0}', space=sflag, size = 0x4, scoped, tag = 'scoped memory for tpu_custom_call.1']
  #allocation3 [shape = 's32[1]{0:T(128)S(6)}', space=smem, size = 0x200, scoped, tag = 'prefetched SMEM operand 0']
  #allocation4 [shape = 'f32[1,1]{1,0:T(1,128)S(1)}', space=vmem, size = 0x200, scoped, tag = 'scoped memory for tpu_custom_call.1']
  %s0 = inlined_call_operand.<no memory space> [shape: s32[1], index: 0, kind: input, shape index: {}]
  %s1 = inlined_call_operand.vmem [shape: s32[8,1], index: 1, kind: input, shape index: {}]
  %s2 = inlined_call_operand.vmem [shape: s32[1,64,1], index: 2, kind: input, shape index: {}]
  %s3 = inlined_call_operand.vmem [shape: f32[32,96], index: 3, kind: input, shape index: {}]
  %s4 = inlined_call_operand.vmem [shape: f32[32,96], index: 4, kind: input, shape index: {}]
  %s5 = inlined_call_operand.vmem [shape: f32[1,32], index: 5, kind: input, shape index: {}]
  %s6 = inlined_call_operand.hbm [shape: f32[32,32], index: 6, kind: input, shape index: {}]
  %s7 = inlined_call_operand.vmem [shape: f32[1,32], index: 7, kind: input, shape index: {}]
  %s8 = inlined_call_operand.hbm [shape: f32[32,32], index: 8, kind: input, shape index: {}]
  %s9 = inlined_call_operand.vmem [shape: f32[1,32], index: 9, kind: input, shape index: {}]
  %s10 = inlined_call_operand.vmem [shape: f32[1,32], index: 10, kind: input, shape index: {}]
  %s11 = inlined_call_operand.<no memory space> [shape: f32[1,1], index: 11, kind: input, shape index: {}]
  %s12 = inlined_call_operand.vmem [shape: f32[8,1], index: 12, kind: output, shape index: {}]
  %s13 = sld [smem:[#allocation0]]
  $region69: #{tpu_custom_call.1} parent=0
    _
  %s15 = ssub.s32 1, %s13
  %s16 = scalar_select 0, %s15, %s13
  %17 = sst [smem:[#allocation3]] %s0
  %v18 = vstv %s11
  %19 = vst [vmem:[#allocation4] sm:$0x1] %v18
  $region1: #{tpu_custom_call.1} parent=0
    #allocation5 [shape = 'u8[16384]{0}', space=vmem, size = 0x4000, scoped, tag = 'input window, operand 6, single buffered']
    #allocation6 [shape = 's32[1]{0}', space=sflag, size = 0x4, scoped, tag = 'scoped memory for tpu_custom_call.1']
    #allocation7 [shape = 'u8[16384]{0}', space=vmem, size = 0x4000, scoped, tag = 'input window, operand 8, single buffered']
    #allocation8 [shape = 's32[1]{0}', space=sflag, size = 0x4, scoped, tag = 'scoped memory for tpu_custom_call.1']
    %20 = vsyncpa [#allocation6], 0
    %21 = vsyncpa [#allocation8], 0
    // Predicated region
    $region2: #{tpu_custom_call.1} parent=1 // pred_check
      _
    $region3: #{tpu_custom_call.1} parent=1 // pred_check_branch
      %23 = sbr.rel (0) target = $region5
    $region4: #{tpu_custom_call.1} parent=1 // pred_region
      _
    $region5: #{tpu_custom_call.1} parent=1 // pred_fallthru
      _
    // Predicated region
    $region6: #{tpu_custom_call.1} parent=1 // pred_check
      _
    $region7: #{tpu_custom_call.1} parent=1 // pred_check_branch
      %25 = sbr.rel (0) target = $region9
    $region8: #{tpu_custom_call.1} parent=1 // pred_region
      _
    $region9: #{tpu_custom_call.1} parent=1 // pred_fallthru
      _
    // Predicated region
    $region10: #{tpu_custom_call.1} parent=1 // pred_check
      _
    $region11: #{tpu_custom_call.1} parent=1 // pred_check_branch
      %27 = sbr.rel (0) target = $region13
    $region12: #{tpu_custom_call.1} parent=1 // pred_region
      _
    $region13: #{tpu_custom_call.1} parent=1 // pred_fallthru
      _
    // Predicated region
    $region14: #{tpu_custom_call.1} parent=1 // pred_check
      _
    $region15: #{tpu_custom_call.1} parent=1 // pred_check_branch
      %29 = sbr.rel (0) target = $region17
    $region16: #{tpu_custom_call.1} parent=1 // pred_region
      _
    $region17: #{tpu_custom_call.1} parent=1 // pred_fallthru
      _
    // Predicated region
    $region18: #{tpu_custom_call.1} parent=1 // pred_check
      _
    $region19: #{tpu_custom_call.1} parent=1 // pred_check_branch
      %31 = sbr.rel (0) target = $region21
    $region20: #{tpu_custom_call.1} parent=1 // pred_region
      _
    $region21: #{tpu_custom_call.1} parent=1 // pred_fallthru
      _
    // Predicated region
    $region22: #{tpu_custom_call.1} parent=1 // pred_check
      _
    $region23: #{tpu_custom_call.1} parent=1 // pred_check_branch
      %33 = sbr.rel (0) target = $region25
    $region24: #{tpu_custom_call.1} parent=1 // pred_region
      %s35 = ssub.s32 512, 512
      %36 = vsyncadd [#allocation6], %s35
      %s37 = sshll.u32 [#allocation5], 4
      %s38 = int_to_ptr.vmem [resolvable:$true] %s37
      %43 = dma.hbm_to_vmem [thread:$0]  %s6, 512, %s38, [#allocation6], 128, 128, 8
    $region25: #{tpu_custom_call.1} parent=1 // pred_fallthru
      _
    // Predicated region
    $region26: #{tpu_custom_call.1} parent=1 // pred_check
      _
    $region27: #{tpu_custom_call.1} parent=1 // pred_check_branch
      %45 = sbr.rel (0) target = $region29
    $region28: #{tpu_custom_call.1} parent=1 // pred_region
      _
    $region29: #{tpu_custom_call.1} parent=1 // pred_fallthru
      _
    // Predicated region
    $region30: #{tpu_custom_call.1} parent=1 // pred_check
      _
    $region31: #{tpu_custom_call.1} parent=1 // pred_check_branch
      %47 = sbr.rel (0) target = $region33
    $region32: #{tpu_custom_call.1} parent=1 // pred_region
      %s49 = ssub.s32 512, 512
      %50 = vsyncadd [#allocation8], %s49
      %s51 = sshll.u32 [#allocation7], 4
      %s52 = int_to_ptr.vmem [resolvable:$true] %s51
      %57 = dma.hbm_to_vmem [thread:$0]  %s8, 512, %s52, [#allocation8], 128, 128, 8
    $region33: #{tpu_custom_call.1} parent=1 // pred_fallthru
      _
    // Predicated region
    $region34: #{tpu_custom_call.1} parent=1 // pred_check
      _
    $region35: #{tpu_custom_call.1} parent=1 // pred_check_branch
      %59 = sbr.rel (0) target = $region37
    $region36: #{tpu_custom_call.1} parent=1 // pred_region
      _
    $region37: #{tpu_custom_call.1} parent=1 // pred_fallthru
      _
    // Predicated region
    $region38: #{tpu_custom_call.1} parent=1 // pred_check
      _
    $region39: #{tpu_custom_call.1} parent=1 // pred_check_branch
      %61 = sbr.rel (0) target = $region41
    $region40: #{tpu_custom_call.1} parent=1 // pred_region
      _
    $region41: #{tpu_custom_call.1} parent=1 // pred_fallthru
      _
    // Predicated region
    $region42: #{tpu_custom_call.1} parent=1 // pred_check
      _
    $region43: #{tpu_custom_call.1} parent=1 // pred_check_branch
      %63 = sbr.rel (0) target = $region45
    $region44: #{tpu_custom_call.1} parent=1 // pred_region
      _
    $region45: #{tpu_custom_call.1} parent=1 // pred_fallthru
      _
    // Predicated region
    $region46: #{tpu_custom_call.1} parent=1 // pred_check
      _
    $region47: #{tpu_custom_call.1} parent=1 // pred_check_branch
      %65 = sbr.rel (0) target = $region49
    $region48: #{tpu_custom_call.1} parent=1 // pred_region
      %66 = dma.done [#allocation6], 512
    $region49: #{tpu_custom_call.1} parent=1 // pred_fallthru
      _
    // Predicated region
    $region50: #{tpu_custom_call.1} parent=1 // pred_check
      _
    $region51: #{tpu_custom_call.1} parent=1 // pred_check_branch
      %68 = sbr.rel (0) target = $region53
    $region52: #{tpu_custom_call.1} parent=1 // pred_region
      %69 = dma.done [#allocation8], 512
    $region53: #{tpu_custom_call.1} parent=1 // pred_fallthru
      _
    %v70 = vld [vmem:[%s1] sm:$0xff]
    %v71 = vld [vmem:[%s3] sm:$0xff]
    %v72 = vld [vmem:[%s3 + $0x8] sm:$0xff]
    %v73 = vld [vmem:[%s3 + $0x10] sm:$0xff]
    %v74 = vld [vmem:[%s3 + $0x18] sm:$0xff]
    %v75 = vld [vmem:[%s4] sm:$0xff]
    %v76 = vld [vmem:[%s4 + $0x8] sm:$0xff]
    %v77 = vld [vmem:[%s4 + $0x10] sm:$0xff]
    %v78 = vld [vmem:[%s4 + $0x18] sm:$0xff]
    %v79 = vld [vmem:[%s5] sm:$0x1]
    %v80 = vlaneseq
    %v81 = vand.u32 %v80, 127
    %s82 = sld [smem:[#allocation3]]
    %p83 = scmp.lt.s32.totalorder %s82, 8
    %s84 = scalar_select %p83, %s82, 8
    // While loop
    $region54: #{tpu_custom_call.1} parent=1 // loop_pre_header
      _
    $region55: #{tpu_custom_call.1} parent=1 // loop_header
      %s86 = sphi 0, %s88
      %p87 = scmp.ge.s32.totalorder %s86, %s84
      %v91 = vphi 0.0, %v292
    $region56: #{tpu_custom_call.1} parent=1 // loop_header_branch
      %90 = sbr.rel (%p87) target = $region60
    $region57: #{tpu_custom_call.1} parent=1 // loop_body
      %s92 = smul.u32 %s86, 8
      %s93 = scalar_lea.vmem %s2, %s92
      %v94 = vld [vmem:[%s93] sm:$0xff]
      %95 = vset.pattern.permute.xlu0 0
      %96 = vperm.xlu0 %95, %v94
      %v97 = vpop.permute.xlu0 %96
      %vm98 = vcmp.eq.s32.totalorder %v81, %v97
      %v99 = vsel %vm98, 1, 0
      %v100 = vcvt.s32.f32 %v99
      %vm101 = vcmask 261120
      %v103 = vsel %vm101, %v100, 0
      %105 = vmatprep.subr.mxu0 0.0
      %106 = vmatpush1.msra.mxu0 0.0
      %107 = vmatprep.subr.mxu0 0.0
      %108 = vmatpush1.msra.mxu0 0.0
      %109 = vmatprep.subr.mxu0 0.0
      %110 = vmatpush1.msra.mxu0 0.0
      %111 = vmatprep.subr.mxu0 0.0
      %112 = vmatpush1.msra.mxu0 0.0
      %113 = vmatprep.subr.mxu0 0.0
      %114 = vmatpush1.msra.mxu0 0.0
      %115 = vmatprep.subr.mxu0 0.0
      %116 = vmatpush1.msra.mxu0 0.0
      %117 = vmatprep.subr.mxu0 0.0
      %118 = vmatpush1.msra.mxu0 0.0
      %119 = vmatprep.subr.mxu0 0.0
      %120 = vmatpush1.msra.mxu0 0.0
      %121 = vmatprep.subr.mxu0 0.0
      %122 = vmatpush1.msra.mxu0 0.0
      %123 = vmatprep.subr.mxu0 0.0
      %124 = vmatpush1.msra.mxu0 0.0
      %125 = vmatprep.subr.mxu0 0.0
      %126 = vmatpush1.msra.mxu0 0.0
      %127 = vmatprep.subr.mxu0 0.0
      %128 = vmatpush1.msra.mxu0 0.0
      %129 = vmatprep.subr.mxu0 0.0
      %130 = vmatpush1.msra.mxu0 %v74
      %131 = vmatprep.subr.mxu0 0.0
      %132 = vmatpush1.msra.mxu0 %v73
      %133 = vmatprep.subr.mxu0 0.0
      %134 = vmatpush1.msra.mxu0 %v72
      %135 = vmatprep.subr.mxu0 0.0
      %136 = vmatpush1.msra.mxu0 %v71
      %137 = vmatprep.subr.mxu0 0.0
      %138 = vmatpush2.msra.mxu0 0.0
      %139 = vmatprep.subr.mxu0 0.0
      %140 = vmatpush2.msra.mxu0 0.0
      %141 = vmatprep.subr.mxu0 0.0
      %142 = vmatpush2.msra.mxu0 0.0
      %143 = vmatprep.subr.mxu0 0.0
      %144 = vmatpush2.msra.mxu0 0.0
      %145 = vmatprep.subr.mxu0 0.0
      %146 = vmatpush2.msra.mxu0 0.0
      %147 = vmatprep.subr.mxu0 0.0
      %148 = vmatpush2.msra.mxu0 0.0
      %149 = vmatprep.subr.mxu0 0.0
      %150 = vmatpush2.msra.mxu0 0.0
      %151 = vmatprep.subr.mxu0 0.0
      %152 = vmatpush2.msra.mxu0 0.0
      %153 = vmatprep.subr.mxu0 0.0
      %154 = vmatpush2.msra.mxu0 0.0
      %155 = vmatprep.subr.mxu0 0.0
      %156 = vmatpush2.msra.mxu0 0.0
      %157 = vmatprep.subr.mxu0 0.0
      %158 = vmatpush2.msra.mxu0 0.0
      %159 = vmatprep.subr.mxu0 0.0
      %160 = vmatpush2.msra.mxu0 0.0
      %161 = vmatprep.subr.mxu0 0.0
      %162 = vmatpush2.msra.mxu0 0.0
      %163 = vmatprep.subr.mxu0 0.0
      %164 = vmatpush2.msra.mxu0 0.0
      %165 = vmatprep.subr.mxu0 0.0
      %166 = vmatpush2.msra.mxu0 0.0
      %167 = vmatprep.subr.mxu0 0.0
      %168 = vmatpush2.msra.mxu0 0.0
      %169 = vmatprep.mubr.f32.mxu0 0.0
      %170 = vmatmul.mubr.f32.gmra.mxu0 %v103
      %v171 = vpop.f32.mrf.mxu0
      %v172 = vadd.f32 0.0, %v171
      %v173 = vpop.f32.mrf.mxu0
      %174 = vdwg.mxu0
      %176 = vrot.lane.b32.xlu0 %v91, 96
      %v177 = vpop.permute.xlu0 %176
      %v178 = vsel %vm101, %v177, 0
      %180 = vmatprep.subr.mxu0 0.0
      %181 = vmatpush1.msra.mxu0 0.0
      %182 = vmatprep.subr.mxu0 0.0
      %183 = vmatpush1.msra.mxu0 0.0
      %184 = vmatprep.subr.mxu0 0.0
      %185 = vmatpush1.msra.mxu0 0.0
      %186 = vmatprep.subr.mxu0 0.0
      %187 = vmatpush1.msra.mxu0 0.0
      %188 = vmatprep.subr.mxu0 0.0
      %189 = vmatpush1.msra.mxu0 0.0
      %190 = vmatprep.subr.mxu0 0.0
      %191 = vmatpush1.msra.mxu0 0.0
      %192 = vmatprep.subr.mxu0 0.0
      %193 = vmatpush1.msra.mxu0 0.0
      %194 = vmatprep.subr.mxu0 0.0
      %195 = vmatpush1.msra.mxu0 0.0
      %196 = vmatprep.subr.mxu0 0.0
      %197 = vmatpush1.msra.mxu0 0.0
      %198 = vmatprep.subr.mxu0 0.0
      %199 = vmatpush1.msra.mxu0 0.0
      %200 = vmatprep.subr.mxu0 0.0
      %201 = vmatpush1.msra.mxu0 0.0
      %202 = vmatprep.subr.mxu0 0.0
      %203 = vmatpush1.msra.mxu0 0.0
      %204 = vmatprep.subr.mxu0 0.0
      %205 = vmatpush1.msra.mxu0 %v78
      %206 = vmatprep.subr.mxu0 0.0
      %207 = vmatpush1.msra.mxu0 %v77
      %208 = vmatprep.subr.mxu0 0.0
      %209 = vmatpush1.msra.mxu0 %v76
      %210 = vmatprep.subr.mxu0 0.0
      %211 = vmatpush1.msra.mxu0 %v75
      %212 = vmatprep.subr.mxu0 0.0
      %213 = vmatpush2.msra.mxu0 0.0
      %214 = vmatprep.subr.mxu0 0.0
      %215 = vmatpush2.msra.mxu0 0.0
      %216 = vmatprep.subr.mxu0 0.0
      %217 = vmatpush2.msra.mxu0 0.0
      %218 = vmatprep.subr.mxu0 0.0
      %219 = vmatpush2.msra.mxu0 0.0
      %220 = vmatprep.subr.mxu0 0.0
      %221 = vmatpush2.msra.mxu0 0.0
      %222 = vmatprep.subr.mxu0 0.0
      %223 = vmatpush2.msra.mxu0 0.0
      %224 = vmatprep.subr.mxu0 0.0
      %225 = vmatpush2.msra.mxu0 0.0
      %226 = vmatprep.subr.mxu0 0.0
      %227 = vmatpush2.msra.mxu0 0.0
      %228 = vmatprep.subr.mxu0 0.0
      %229 = vmatpush2.msra.mxu0 0.0
      %230 = vmatprep.subr.mxu0 0.0
      %231 = vmatpush2.msra.mxu0 0.0
      %232 = vmatprep.subr.mxu0 0.0
      %233 = vmatpush2.msra.mxu0 0.0
      %234 = vmatprep.subr.mxu0 0.0
      %235 = vmatpush2.msra.mxu0 0.0
      %236 = vmatprep.subr.mxu0 0.0
      %237 = vmatpush2.msra.mxu0 0.0
      %238 = vmatprep.subr.mxu0 0.0
      %239 = vmatpush2.msra.mxu0 0.0
      %240 = vmatprep.subr.mxu0 0.0
      %241 = vmatpush2.msra.mxu0 0.0
      %242 = vmatprep.subr.mxu0 0.0
      %243 = vmatpush2.msra.mxu0 0.0
      %244 = vmatprep.mubr.f32.mxu0 0.0
      %245 = vmatmul.mubr.f32.gmra.mxu0 %v178
      %v246 = vpop.f32.mrf.mxu0
      %v247 = vadd.f32 0.0, %v246
      %v248 = vpop.f32.mrf.mxu0
      %249 = vdwg.mxu0
      %v250 = vadd.f32 %v172, %v247
      %v251 = vxor.u32 %v250, 2147483648
      %v252 = vmul.f32 %v251, 1.442695
      %v253 = vpow.pop %v252
      %v254 = vadd.f32 %v253, 1.0
      %v255 = vrcp.pop %v254
      %v256 = vmul.f32 1.0, %v255
      %v258 = vlaneseq
      %v259 = vshrl.u32 %v258, 7
      %v260 = vsub.s32 0, %v259
      %v261 = vrot.slane %v79, %v260
      %262 = vrot.lane.b32.xlu0 %v261, 64
      %v263 = vpop.permute.xlu0 %262
      %v265 = vadd.f32 %v247, %v263
      %267 = vrot.lane.b32.xlu0 %v265, 64
      %v268 = vpop.permute.xlu0 %267
      %v270 = vmul.f32 %v256, %v268
      %272 = vrot.lane.b32.xlu0 %v270, 64
      %v273 = vpop.permute.xlu0 %272
      %v275 = vadd.f32 %v172, %v273
      %v276 = vtanh.pop %v275
      %v277 = vsub.f32 1.0, %v256
      %279 = vrot.lane.b32.xlu0 %v276, 96
      %v280 = vpop.permute.xlu0 %279
      %v282 = vmul.f32 %v277, %v280
      %v283 = vmul.f32 %v256, %v91
      %v284 = vadd.f32 %v282, %v283
      %v285 = vstv %s86
      %vm286 = vcmp.gt.s32.totalorder %v70, %v285
      %v287 = vsel %vm286, 1, 0
      %288 = vset.pattern.permute.xlu0 0
      %289 = vperm.xlu0 %288, %v287
      %v290 = vpop.permute.xlu0 %289
      %vm291 = vcmp.eq.s32.totalorder %v290, 1
      %v292 = vsel %vm291, %v284, %v91
    $region58: #{tpu_custom_call.1} parent=1 // loop_footer
      %s88 = sadd.s32 %s86, 1
    $region59: #{tpu_custom_call.1} parent=1 // loop_footer_branch
      %85 = sbr.rel target = $region55
    $region60: #{tpu_custom_call.1} parent=1 // loop_exit
      _
    %v293 = vld [vmem:[#allocation5] sm:$0xff]
    %v294 = vld [vmem:[#allocation5 + $0x8] sm:$0xff]
    %v295 = vld [vmem:[#allocation5 + $0x10] sm:$0xff]
    %v296 = vld [vmem:[#allocation5 + $0x18] sm:$0xff]
    %v297 = vld [vmem:[%s7] sm:$0x1]
    %v299 = vlaneseq
    %v300 = vshrl.u32 %v299, 7
    %v301 = vsub.s32 0, %v300
    %v302 = vrot.slane %v297, %v301
    %305 = vrot.lane.b32.xlu0 %v91, 96
    %v306 = vpop.permute.xlu0 %305
    %vm307 = vcmask 261120
    %v308 = vsel %vm307, %v306, 0
    %310 = vmatprep.subr.mxu0 0.0
    %311 = vmatpush1.msra.mxu0 0.0
    %312 = vmatprep.subr.mxu0 0.0
    %313 = vmatpush1.msra.mxu0 0.0
    %314 = vmatprep.subr.mxu0 0.0
    %315 = vmatpush1.msra.mxu0 0.0
    %316 = vmatprep.subr.mxu0 0.0
    %317 = vmatpush1.msra.mxu0 0.0
    %318 = vmatprep.subr.mxu0 0.0
    %319 = vmatpush1.msra.mxu0 0.0
    %320 = vmatprep.subr.mxu0 0.0
    %321 = vmatpush1.msra.mxu0 0.0
    %322 = vmatprep.subr.mxu0 0.0
    %323 = vmatpush1.msra.mxu0 0.0
    %324 = vmatprep.subr.mxu0 0.0
    %325 = vmatpush1.msra.mxu0 0.0
    %326 = vmatprep.subr.mxu0 0.0
    %327 = vmatpush1.msra.mxu0 0.0
    %328 = vmatprep.subr.mxu0 0.0
    %329 = vmatpush1.msra.mxu0 0.0
    %330 = vmatprep.subr.mxu0 0.0
    %331 = vmatpush1.msra.mxu0 0.0
    %332 = vmatprep.subr.mxu0 0.0
    %333 = vmatpush1.msra.mxu0 0.0
    %334 = vmatprep.subr.mxu0 0.0
    %335 = vmatpush1.msra.mxu0 %v296
    %336 = vmatprep.subr.mxu0 0.0
    %337 = vmatpush1.msra.mxu0 %v295
    %338 = vmatprep.subr.mxu0 0.0
    %339 = vmatpush1.msra.mxu0 %v294
    %340 = vmatprep.subr.mxu0 0.0
    %341 = vmatpush1.msra.mxu0 %v293
    %342 = vmatprep.subr.mxu0 0.0
    %343 = vmatpush2.msra.mxu0 0.0
    %344 = vmatprep.subr.mxu0 0.0
    %345 = vmatpush2.msra.mxu0 0.0
    %346 = vmatprep.subr.mxu0 0.0
    %347 = vmatpush2.msra.mxu0 0.0
    %348 = vmatprep.subr.mxu0 0.0
    %349 = vmatpush2.msra.mxu0 0.0
    %350 = vmatprep.subr.mxu0 0.0
    %351 = vmatpush2.msra.mxu0 0.0
    %352 = vmatprep.subr.mxu0 0.0
    %353 = vmatpush2.msra.mxu0 0.0
    %354 = vmatprep.subr.mxu0 0.0
    %355 = vmatpush2.msra.mxu0 0.0
    %356 = vmatprep.subr.mxu0 0.0
    %357 = vmatpush2.msra.mxu0 0.0
    %358 = vmatprep.subr.mxu0 0.0
    %359 = vmatpush2.msra.mxu0 0.0
    %360 = vmatprep.subr.mxu0 0.0
    %361 = vmatpush2.msra.mxu0 0.0
    %362 = vmatprep.subr.mxu0 0.0
    %363 = vmatpush2.msra.mxu0 0.0
    %364 = vmatprep.subr.mxu0 0.0
    %365 = vmatpush2.msra.mxu0 0.0
    %366 = vmatprep.subr.mxu0 0.0
    %367 = vmatpush2.msra.mxu0 0.0
    %368 = vmatprep.subr.mxu0 0.0
    %369 = vmatpush2.msra.mxu0 0.0
    %370 = vmatprep.subr.mxu0 0.0
    %371 = vmatpush2.msra.mxu0 0.0
    %372 = vmatprep.subr.mxu0 0.0
    %373 = vmatpush2.msra.mxu0 0.0
    %374 = vmatprep.mubr.f32.mxu0 0.0
    %375 = vmatmul.mubr.f32.gmra.mxu0 %v308
    %v376 = vpop.f32.mrf.mxu0
    %v377 = vadd.f32 %v302, %v376
    %v378 = vpop.f32.mrf.mxu0
    %379 = vdwg.mxu0
    %v380 = vmax.f32 %v377, 0.0
    %v381 = vld [vmem:[#allocation7] sm:$0xff]
    %v382 = vld [vmem:[#allocation7 + $0x8] sm:$0xff]
    %v383 = vld [vmem:[#allocation7 + $0x10] sm:$0xff]
    %v384 = vld [vmem:[#allocation7 + $0x18] sm:$0xff]
    %v385 = vld [vmem:[%s9] sm:$0x1]
    %v387 = vlaneseq
    %v388 = vshrl.u32 %v387, 7
    %v389 = vsub.s32 0, %v388
    %v390 = vrot.slane %v385, %v389
    %v393 = vsel %vm307, %v380, 0
    %395 = vmatprep.subr.mxu0 0.0
    %396 = vmatpush1.msra.mxu0 0.0
    %397 = vmatprep.subr.mxu0 0.0
    %398 = vmatpush1.msra.mxu0 0.0
    %399 = vmatprep.subr.mxu0 0.0
    %400 = vmatpush1.msra.mxu0 0.0
    %401 = vmatprep.subr.mxu0 0.0
    %402 = vmatpush1.msra.mxu0 0.0
    %403 = vmatprep.subr.mxu0 0.0
    %404 = vmatpush1.msra.mxu0 0.0
    %405 = vmatprep.subr.mxu0 0.0
    %406 = vmatpush1.msra.mxu0 0.0
    %407 = vmatprep.subr.mxu0 0.0
    %408 = vmatpush1.msra.mxu0 0.0
    %409 = vmatprep.subr.mxu0 0.0
    %410 = vmatpush1.msra.mxu0 0.0
    %411 = vmatprep.subr.mxu0 0.0
    %412 = vmatpush1.msra.mxu0 0.0
    %413 = vmatprep.subr.mxu0 0.0
    %414 = vmatpush1.msra.mxu0 0.0
    %415 = vmatprep.subr.mxu0 0.0
    %416 = vmatpush1.msra.mxu0 0.0
    %417 = vmatprep.subr.mxu0 0.0
    %418 = vmatpush1.msra.mxu0 0.0
    %419 = vmatprep.subr.mxu0 0.0
    %420 = vmatpush1.msra.mxu0 %v384
    %421 = vmatprep.subr.mxu0 0.0
    %422 = vmatpush1.msra.mxu0 %v383
    %423 = vmatprep.subr.mxu0 0.0
    %424 = vmatpush1.msra.mxu0 %v382
    %425 = vmatprep.subr.mxu0 0.0
    %426 = vmatpush1.msra.mxu0 %v381
    %427 = vmatprep.subr.mxu0 0.0
    %428 = vmatpush2.msra.mxu0 0.0
    %429 = vmatprep.subr.mxu0 0.0
    %430 = vmatpush2.msra.mxu0 0.0
    %431 = vmatprep.subr.mxu0 0.0
    %432 = vmatpush2.msra.mxu0 0.0
    %433 = vmatprep.subr.mxu0 0.0
    %434 = vmatpush2.msra.mxu0 0.0
    %435 = vmatprep.subr.mxu0 0.0
    %436 = vmatpush2.msra.mxu0 0.0
    %437 = vmatprep.subr.mxu0 0.0
    %438 = vmatpush2.msra.mxu0 0.0
    %439 = vmatprep.subr.mxu0 0.0
    %440 = vmatpush2.msra.mxu0 0.0
    %441 = vmatprep.subr.mxu0 0.0
    %442 = vmatpush2.msra.mxu0 0.0
    %443 = vmatprep.subr.mxu0 0.0
    %444 = vmatpush2.msra.mxu0 0.0
    %445 = vmatprep.subr.mxu0 0.0
    %446 = vmatpush2.msra.mxu0 0.0
    %447 = vmatprep.subr.mxu0 0.0
    %448 = vmatpush2.msra.mxu0 0.0
    %449 = vmatprep.subr.mxu0 0.0
    %450 = vmatpush2.msra.mxu0 0.0
    %451 = vmatprep.subr.mxu0 0.0
    %452 = vmatpush2.msra.mxu0 0.0
    %453 = vmatprep.subr.mxu0 0.0
    %454 = vmatpush2.msra.mxu0 0.0
    %455 = vmatprep.subr.mxu0 0.0
    %456 = vmatpush2.msra.mxu0 0.0
    %457 = vmatprep.subr.mxu0 0.0
    %458 = vmatpush2.msra.mxu0 0.0
    %459 = vmatprep.mubr.f32.mxu0 0.0
    %460 = vmatmul.mubr.f32.gmra.mxu0 %v393
    %v461 = vpop.f32.mrf.mxu0
    %v462 = vadd.f32 %v390, %v461
    %v463 = vpop.f32.mrf.mxu0
    %464 = vdwg.mxu0
    %v465 = vtanh.pop %v462
    %v466 = vld [vmem:[%s10] sm:$0x1]
    %v468 = vlaneseq
    %v469 = vshrl.u32 %v468, 7
    %v470 = vsub.s32 0, %v469
    %v471 = vrot.slane %v466, %v470
    %v473 = vmul.f32 %v465, %v471
    %v474 = vsel %vm307, %v473, 0.0
    %475 = vadd.xlane.f32.xlu0 %v474
    %v476 = vpop.xlane.xlu0 %475
    %v477 = vld [vmem:[#allocation4] sm:$0x1]
    %v479 = vlaneseq
    %v480 = vshrl.u32 %v479, 7
    %v481 = vsub.s32 0, %v480
    %v482 = vrot.slane %v477, %v481
    %v484 = vadd.f32 %v476, %v482
    %vm485 = vcmask 7168
    %486 = vst.msk [vmem:[%s12] sm:$0xff] %vm485, %v484
    // Predicated region
    $region61: #{tpu_custom_call.1} parent=1 // pred_check
      _
    $region62: #{tpu_custom_call.1} parent=1 // pred_check_branch
      %488 = sbr.rel (0) target = $region64
    $region63: #{tpu_custom_call.1} parent=1 // pred_region
      _
    $region64: #{tpu_custom_call.1} parent=1 // pred_fallthru
      _
    // Predicated region
    $region65: #{tpu_custom_call.1} parent=1 // pred_check
      _
    $region66: #{tpu_custom_call.1} parent=1 // pred_check_branch
      %490 = sbr.rel (0) target = $region68
    $region67: #{tpu_custom_call.1} parent=1 // pred_region
      _
    $region68: #{tpu_custom_call.1} parent=1 // pred_fallthru
      _
    %491 = vsyncpa [#allocation6], 1
    %492 = vsyncpa [#allocation8], 1

</llo_original>
